<compile_context>
chip_gen: v7x
topology: tpu7x:2x2x1
jax: 0.10.0
libtpu: 0.0.40
codegen_flags: <defaults>
</compile_context>

<pallas_src>
import functools

import jax
import jax.numpy as jnp
from jax.experimental import pallas as pl
from jax.experimental.pallas import tpu as pltpu


def _round_up(x, m):
    return ((x + m - 1) // m) * m


def _rvq_fused_kernel(x_ref, cbt_ref, csq_ref, out_ref, idx_ref, side_ref,
                      *, H, M, D, R, T_valid, needs_mask, cross_in_bf16):
    """One grid step == one tile of flattened tokens.

    x_ref    : (Tb, F)        residual-VQ input tile (F = H*D), f32
    cbt_ref  : (F, H*M)       block-diagonal codebook transpose (head h occupies
                              rows [h*D:(h+1)*D] x cols [h*M:(h+1)*M])
    csq_ref  : (1, H*M)       precomputed ||c||^2 per (head, code) lane
    out_ref  : (Tb, F)        sum of quantized vectors over all R steps (lane-dense)
    idx_ref  : (H*R, Tb)      argmin indices, row h*R + i, tokens on the lane axis
    side_ref : (1, R+1, H*M)  rows 0..R-1: per-code counts for step i;
                              row R, lanes 0..R-1: per-step sum of squared residual
    """
    F = H * D
    HM = H * M
    x = x_ref[...]                                        # (Tb, F)
    Tb = x.shape[0]

    # Validity masks for the (possibly padded) last tile.
    if needs_mask:
        g = pl.program_id(0)
        col = jax.lax.broadcasted_iota(jnp.int32, (1, Tb), 1) + g * Tb
        vrow = (col < T_valid).astype(jnp.float32)        # (1, Tb): MXU count mask
        row = jax.lax.broadcasted_iota(jnp.int32, (Tb, 1), 0) + g * Tb
        vcol = (row < T_valid).astype(jnp.float32)        # (Tb, 1): SSE mask
    else:
        vrow = jnp.ones((1, Tb), jnp.float32)
        vcol = None

    csq = csq_ref[...]                                    # (1, HM)
    # Hoist loop-invariant iotas (JAX does not CSE broadcasts inside loops).
    lanes = jax.lax.broadcasted_iota(jnp.int32, (Tb, HM), 1)
    side_lane = jax.lax.broadcasted_iota(jnp.int32, (1, HM), 1)

    if cross_in_bf16:
        cbt_bf16 = cbt_ref[...].astype(jnp.bfloat16)      # cast once; cross term only

    residual = x
    out_acc = jnp.zeros_like(x)
    idx_rows = [None] * (H * R)        # (1, Tb) int32, row h*R + i
    cnt_rows = [None] * R              # (1, HM) f32
    sse_row = jnp.zeros((1, HM), jnp.float32)

    # R and H are small & static -> fully unrolled.
    for i in range(R):
        # Re-read the (single-copy) block-diag codebook at the use site each step:
        # static Ref reads are cheap and keep it out of long-lived vregs.
        cbt = cbt_ref[...]                                # (F, HM)

        # squared distance up to a per-row constant: ||c||^2 - 2 q.c, all heads at once
        if cross_in_bf16:
            cross = jnp.dot(residual.astype(jnp.bfloat16), cbt_bf16,
                            preferred_element_type=jnp.float32)            # (Tb, HM)
        else:
            cross = jnp.dot(residual, cbt, preferred_element_type=jnp.float32)
        d2 = csq - 2.0 * cross                                             # (Tb, HM)

        # per-head argmin + block one-hot over the full H*M lane width
        oh_total = None
        for h in range(H):
            idxh = jnp.argmin(d2[:, h * M:(h + 1) * M], axis=-1).astype(jnp.int32)  # (Tb,)
            idx_rows[h * R + i] = idxh[None, :]                                      # (1, Tb)
            ohh = (lanes == (idxh[:, None] + h * M)).astype(jnp.float32)             # (Tb, HM)
            oh_total = ohh if oh_total is None else oh_total + ohh

        # gather == block one-hot @ block-diag codebook (transposed contraction of the
        # SAME array used for the cross term; matches einsum('bhnm,bhmd->bhnd'))
        quant = jax.lax.dot_general(oh_total, cbt, (((1,), (1,)), ((), ())),
                                    preferred_element_type=jnp.float32)     # (Tb, F)

        residual = residual - quant
        out_acc = out_acc + quant

        # per-code counts on the MXU: (1, Tb) validity row @ (Tb, HM) one-hot
        cnt_rows[i] = jnp.dot(vrow, oh_total, preferred_element_type=jnp.float32)  # (1, HM)

        # loss_i = mse(residual_in, quant) = mean(residual_after^2)
        err = residual if vcol is None else residual * vcol
        s = jnp.sum(jnp.sum(err * err, axis=1, keepdims=True),
                    axis=0, keepdims=True)                                  # (1, 1)
        sse_row = sse_row + jnp.where(side_lane == i, s, 0.0)

    out_ref[...] = out_acc
    idx_ref[...] = jnp.concatenate(idx_rows, axis=0)                        # (H*R, Tb)
    side_ref[...] = jnp.concatenate(cnt_rows + [sse_row], axis=0).reshape(1, R + 1, HM)


def residual_vq_forward(x, codebooks, budget_ema, num_residuals,
                        expire_threshold=0.05, token_tile=512,
                        cross_in_bf16=False, vmem_limit_bytes=64 * 1024 * 1024):
    """ResidualVQ.forward (eval mode), shared codebook across residual steps.

    x          : (B, N, F) with F = H * D  (channels-last, kept end-to-end)
    codebooks  : (H, M, D)
    budget_ema : (H, M)
    returns (out, info) mirroring the PyTorch module.
    """
    B, N, F = x.shape
    H, M, D = codebooks.shape
    assert F == H * D, "features must equal num_heads * head_features"
    R = int(num_residuals)
    HM = H * M
    assert R <= HM, "num_residuals must fit in the side-output lane width"
    T = B * N

    # --- token tiling --------------------------------------------------------
    T8 = _round_up(T, 8)
    Tb = max(8, min(int(token_tile), T8))
    Tb = _round_up(Tb, 8)
    if Tb < T8:
        # multiple tiles: keep them 128-lane aligned so the (H*R, Tb) index tile and
        # the MXU row dimension stay dense.
        Tb = _round_up(Tb, 128)
    if T8 > 256 and pl.cdiv(T, Tb) < 2:
        # big single-tile problem: split so the "parallel" axis can feed both
        # TensorCores on a v7x megacore.
        Tb = _round_up(pl.cdiv(T, 2), 128)
    T_pad = pl.cdiv(T, Tb) * Tb
    G = T_pad // Tb

    x_flat = x.reshape(T, F).astype(jnp.float32)
    if T_pad != T:
        x_flat = jnp.pad(x_flat, ((0, T_pad - T), (0, 0)))

    # --- codebook prep (done ONCE in the wrapper) -----------------------------
    cb = codebooks.astype(jnp.float32)                    # (H, M, D)
    cbt = jnp.swapaxes(cb, 1, 2)                          # (H, D, M)
    eye = jnp.eye(H, dtype=jnp.float32)
    # block-diagonal codebook transpose: cbt_bd[h*D+d, g*M+m] = cb[h, m, d] * (h == g)
    cbt_bd = (cbt[:, :, None, :] * eye[:, None, :, None]).reshape(F, HM)
    csq = jnp.sum(cb * cb, axis=-1).reshape(1, HM)        # ||c||^2 per (head, code) lane

    kernel = functools.partial(
        _rvq_fused_kernel, H=H, M=M, D=D, R=R,
        T_valid=T, needs_mask=(T_pad != T), cross_in_bf16=bool(cross_in_bf16))

    out_p, idx_p, side_p = pl.pallas_call(
        kernel,
        out_shape=(
            jax.ShapeDtypeStruct((T_pad, F), jnp.float32),
            jax.ShapeDtypeStruct((H * R, T_pad), jnp.int32),
            jax.ShapeDtypeStruct((G, R + 1, HM), jnp.float32),
        ),
        grid=(G,),
        in_specs=[
            pl.BlockSpec((Tb, F), lambda g: (g, 0)),
            pl.BlockSpec((F, HM), lambda g: (0, 0)),
            pl.BlockSpec((1, HM), lambda g: (0, 0)),
        ],
        out_specs=(
            pl.BlockSpec((Tb, F), lambda g: (g, 0)),
            pl.BlockSpec((H * R, Tb), lambda g: (0, g)),
            pl.BlockSpec((1, R + 1, HM), lambda g: (g, 0, 0)),
        ),
        compiler_params=pltpu.CompilerParams(
            dimension_semantics=("parallel",),
            vmem_limit_bytes=int(vmem_limit_bytes),
        ),
    )(x_flat, cbt_bd, csq)

    # final output, still channels-last
    out = out_p[:T].reshape(B, N, F)

    # indices: kernel layout [h*R + i, t]  ->  'r b h n -> b h (n r)'
    indices = (idx_p[:, :T].reshape(H, R, B, N)
               .transpose(2, 0, 3, 1).reshape(B, H, N * R))

    # perplexity per step/head from per-tile counts
    cnt = jnp.sum(side_p[:, :R, :], axis=0).reshape(R, H, M)
    mean = cnt / float(B * N)
    perp = jnp.exp(-jnp.sum(mean * jnp.log(mean + 1e-10), axis=-1))    # (R, H)
    perplexity = jnp.transpose(perp, (1, 0)).reshape(H * R)            # 'r h -> (h r)'

    # loss: mean over steps of mse(residual_in, quant) == mean(residual_after^2)
    sse = jnp.sum(side_p[:, R, :R], axis=0)                            # (R,)
    loss = jnp.mean(sse / float(T * F))

    # replaced_codes / budget: eval-mode -> derived from the (static) budget_ema
    repl = jnp.sum((budget_ema < expire_threshold).astype(jnp.int32), axis=-1)   # (H,)
    replaced = jnp.tile(repl[:, None], (1, R)).reshape(H * R)                    # 'r h -> (h r)'
    budget = jnp.tile(budget_ema[None, :, :], (R, 1, 1)).reshape(R * H, M)       # 'r h m -> (r h) m'

    info = {
        "indices": indices,
        "loss": loss,
        "perplexity": perplexity,
        "replaced_codes": replaced,
        "budget": budget,
    }
    return out, info


if __name__ == "__main__":
    # ResidualVQ(num_residuals=2, features=32, num_heads=2, codebook_size=64)
    B, N = 2, 8          # batch, sequence
    H, D, M = 2, 16, 64  # heads, head_features, codebook_size
    R = 2                # num_residuals
    F = H * D

    key = jax.random.PRNGKey(0)
    kx, kc = jax.random.split(key)
    x = jax.random.normal(kx, (B, N, F), dtype=jnp.float32)
    codebooks = jax.random.normal(kc, (H, M, D), dtype=jnp.float32)  # torch.randn init
    budget_ema = jnp.ones((H, M), dtype=jnp.float32)                 # ones buffer

    out, info = residual_vq_forward(x, codebooks, budget_ema, R)
    jax.block_until_ready(out)
    for v in info.values():
        jax.block_until_ready(v)

    assert out.shape == (B, N, F)
    assert info["indices"].shape == (B, H, N * R)
    assert info["perplexity"].shape == (H * R,)
    assert info["replaced_codes"].shape == (H * R,)
    assert info["budget"].shape == (R * H, M)
    assert bool(jnp.isfinite(info["loss"]))

    print("KERNEL_OK")
</pallas_src>

<mosaic_0001>
module attributes {stable_mosaic.version = 11 : i64} {
  func.func @_rvq_fused_kernel(%arg0: i32, %arg1: memref<16x32xf32, #tpu.memory_space<vmem>>, %arg2: memref<32x128xf32, #tpu.memory_space<vmem>>, %arg3: memref<1x128xf32, #tpu.memory_space<vmem>>, %arg4: memref<16x32xf32, #tpu.memory_space<vmem>>, %arg5: memref<4x16xi32, #tpu.memory_space<vmem>>, %arg6: memref<1x3x128xf32, #tpu.memory_space<vmem>>) attributes {dimension_semantics = [#tpu.dimension_semantics<parallel>], iteration_bounds = array<i64: 1>, scalar_prefetch = 0 : i64, scratch_operands = 0 : i64, tpu.core_type = #tpu.core_type<tc>, window_params = [{transform_indices = @transform_0, window_bounds = array<i64: 16, 32>}, {pipeline_mode = #tpu.pipeline_mode<synchronous>, transform_indices = @transform_1, window_bounds = array<i64: 32, 128>}, {pipeline_mode = #tpu.pipeline_mode<synchronous>, transform_indices = @transform_2, window_bounds = array<i64: 1, 128>}, {transform_indices = @transform_3, window_bounds = array<i64: 16, 32>}, {transform_indices = @transform_4, window_bounds = array<i64: 4, 16>}, {transform_indices = @transform_5, window_bounds = array<i64: 1, 3, 128>}]} {
    %c0 = arith.constant 0 : index
    %c0_0 = arith.constant 0 : index
    %0 = vector.load %arg1[%c0, %c0_0] : memref<16x32xf32, #tpu.memory_space<vmem>>, vector<16x32xf32>
    %cst = arith.constant 1.000000e+00 : f32
    %1 = vector.broadcast %cst : f32 to vector<1x16xf32>
    %c0_1 = arith.constant 0 : index
    %c0_2 = arith.constant 0 : index
    %2 = vector.load %arg3[%c0_1, %c0_2] : memref<1x128xf32, #tpu.memory_space<vmem>>, vector<1x128xf32>
    %3 = tpu.iota {dimensions = array<i32: 1>} : vector<16x128xi32>
    %4 = tpu.iota {dimensions = array<i32: 1>} : vector<1x128xi32>
    %cst_3 = arith.constant 0.000000e+00 : f32
    %5 = vector.broadcast %cst_3 : f32 to vector<16x32xf32>
    %cst_4 = arith.constant 0.000000e+00 : f32
    %6 = vector.broadcast %cst_4 : f32 to vector<1x128xf32>
    %c0_5 = arith.constant 0 : index
    %c0_6 = arith.constant 0 : index
    %7 = vector.load %arg2[%c0_5, %c0_6] : memref<32x128xf32, #tpu.memory_space<vmem>>, vector<32x128xf32>
    %cst_7 = arith.constant dense<0.000000e+00> : vector<16x128xf32>
    %8 = tpu.matmul %0, %7, %cst_7 {dimension_numbers = #tpu.dot_dimension_numbers<[1], [0], [0], [1], [0, 0, 1, 1], [], []>} : vector<16x32xf32>, vector<32x128xf32>, vector<16x128xf32> -> vector<16x128xf32>
    %cst_8 = arith.constant 2.000000e+00 : f32
    %9 = vector.broadcast %cst_8 : f32 to vector<16x128xf32>
    %10 = arith.mulf %9, %8 : vector<16x128xf32>
    %11 = vector.broadcast %2 : vector<1x128xf32> to vector<16x128xf32>
    %12 = arith.subf %11, %10 : vector<16x128xf32>
    %13 = vector.extract_strided_slice %12 {offsets = [0, 0], sizes = [16, 64], strides = [1, 1]} : vector<16x128xf32> to vector<16x64xf32>
    %14 = tpu.reduce_index %13 {axis = 1 : i32, kind = #tpu.reduction_kind<arg_min>} : vector<16x64xf32> -> vector<16xi32>
    %15 = vector.shape_cast %14 : vector<16xi32> to vector<1x16xi32>
    %16 = vector.shape_cast %14 : vector<16xi32> to vector<16x1xi32>
    %c0_i32 = arith.constant 0 : i32
    %17 = vector.broadcast %c0_i32 : i32 to vector<16x1xi32>
    %18 = arith.addi %16, %17 : vector<16x1xi32>
    %19 = vector.broadcast %18 : vector<16x1xi32> to vector<16x128xi32>
    %20 = arith.cmpi eq, %3, %19 : vector<16x128xi32>
    %21 = arith.extui %20 : vector<16x128xi1> to vector<16x128xi32>
    %22 = arith.sitofp %21 : vector<16x128xi32> to vector<16x128xf32>
    %23 = vector.extract_strided_slice %12 {offsets = [0, 64], sizes = [16, 64], strides = [1, 1]} : vector<16x128xf32> to vector<16x64xf32>
    %24 = tpu.reduce_index %23 {axis = 1 : i32, kind = #tpu.reduction_kind<arg_min>} : vector<16x64xf32> -> vector<16xi32>
    %25 = vector.shape_cast %24 : vector<16xi32> to vector<1x16xi32>
    %26 = vector.shape_cast %24 : vector<16xi32> to vector<16x1xi32>
    %c64_i32 = arith.constant 64 : i32
    %27 = vector.broadcast %c64_i32 : i32 to vector<16x1xi32>
    %28 = arith.addi %26, %27 : vector<16x1xi32>
    %29 = vector.broadcast %28 : vector<16x1xi32> to vector<16x128xi32>
    %30 = arith.cmpi eq, %3, %29 : vector<16x128xi32>
    %31 = arith.extui %30 : vector<16x128xi1> to vector<16x128xi32>
    %32 = arith.sitofp %31 : vector<16x128xi32> to vector<16x128xf32>
    %33 = arith.addf %22, %32 : vector<16x128xf32>
    %cst_9 = arith.constant dense<0.000000e+00> : vector<16x32xf32>
    %34 = tpu.matmul %33, %7, %cst_9 {dimension_numbers = #tpu.dot_dimension_numbers<[1], [1], [0], [0], [0, 0, 1, 0], [], []>} : vector<16x128xf32>, vector<32x128xf32>, vector<16x32xf32> -> vector<16x32xf32>
    %35 = arith.subf %0, %34 : vector<16x32xf32>
    %36 = arith.addf %5, %34 : vector<16x32xf32>
    %cst_10 = arith.constant dense<0.000000e+00> : vector<1x128xf32>
    %37 = tpu.matmul %1, %33, %cst_10 {dimension_numbers = #tpu.dot_dimension_numbers<[1], [0], [0], [1], [0, 0, 1, 1], [], []>} : vector<1x16xf32>, vector<16x128xf32>, vector<1x128xf32> -> vector<1x128xf32>
    %38 = arith.mulf %35, %35 : vector<16x32xf32>
    %cst_11 = arith.constant dense<0.000000e+00> : vector<16xf32>
    %39 = vector.multi_reduction <add>, %38, %cst_11 [1] : vector<16x32xf32> to vector<16xf32>
    %40 = vector.shape_cast %39 : vector<16xf32> to vector<16x1xf32>
    %cst_12 = arith.constant dense<0.000000e+00> : vector<1xf32>
    %41 = vector.multi_reduction <add>, %40, %cst_12 [0] : vector<16x1xf32> to vector<1xf32>
    %42 = vector.shape_cast %41 : vector<1xf32> to vector<1x1xf32>
    %c0_i32_13 = arith.constant 0 : i32
    %43 = vector.broadcast %c0_i32_13 : i32 to vector<1x128xi32>
    %44 = arith.cmpi eq, %4, %43 : vector<1x128xi32>
    %cst_14 = arith.constant 0.000000e+00 : f32
    %45 = vector.shape_cast %42 : vector<1x1xf32> to vector<1x1xf32>
    %46 = vector.broadcast %45 : vector<1x1xf32> to vector<1x128xf32>
    %47 = vector.broadcast %cst_14 : f32 to vector<1x128xf32>
    %48 = arith.select %44, %46, %47 : vector<1x128xi1>, vector<1x128xf32>
    %49 = arith.addf %6, %48 : vector<1x128xf32>
    %c0_15 = arith.constant 0 : index
    %c0_16 = arith.constant 0 : index
    %50 = vector.load %arg2[%c0_15, %c0_16] : memref<32x128xf32, #tpu.memory_space<vmem>>, vector<32x128xf32>
    %cst_17 = arith.constant dense<0.000000e+00> : vector<16x128xf32>
    %51 = tpu.matmul %35, %50, %cst_17 {dimension_numbers = #tpu.dot_dimension_numbers<[1], [0], [0], [1], [0, 0, 1, 1], [], []>} : vector<16x32xf32>, vector<32x128xf32>, vector<16x128xf32> -> vector<16x128xf32>
    %cst_18 = arith.constant 2.000000e+00 : f32
    %52 = vector.broadcast %cst_18 : f32 to vector<16x128xf32>
    %53 = arith.mulf %52, %51 : vector<16x128xf32>
    %54 = vector.broadcast %2 : vector<1x128xf32> to vector<16x128xf32>
    %55 = arith.subf %54, %53 : vector<16x128xf32>
    %56 = vector.extract_strided_slice %55 {offsets = [0, 0], sizes = [16, 64], strides = [1, 1]} : vector<16x128xf32> to vector<16x64xf32>
    %57 = tpu.reduce_index %56 {axis = 1 : i32, kind = #tpu.reduction_kind<arg_min>} : vector<16x64xf32> -> vector<16xi32>
    %58 = vector.shape_cast %57 : vector<16xi32> to vector<1x16xi32>
    %59 = vector.shape_cast %57 : vector<16xi32> to vector<16x1xi32>
    %c0_i32_19 = arith.constant 0 : i32
    %60 = vector.broadcast %c0_i32_19 : i32 to vector<16x1xi32>
    %61 = arith.addi %59, %60 : vector<16x1xi32>
    %62 = vector.broadcast %61 : vector<16x1xi32> to vector<16x128xi32>
    %63 = arith.cmpi eq, %3, %62 : vector<16x128xi32>
    %64 = arith.extui %63 : vector<16x128xi1> to vector<16x128xi32>
    %65 = arith.sitofp %64 : vector<16x128xi32> to vector<16x128xf32>
    %66 = vector.extract_strided_slice %55 {offsets = [0, 64], sizes = [16, 64], strides = [1, 1]} : vector<16x128xf32> to vector<16x64xf32>
    %67 = tpu.reduce_index %66 {axis = 1 : i32, kind = #tpu.reduction_kind<arg_min>} : vector<16x64xf32> -> vector<16xi32>
    %68 = vector.shape_cast %67 : vector<16xi32> to vector<1x16xi32>
    %69 = vector.shape_cast %67 : vector<16xi32> to vector<16x1xi32>
    %c64_i32_20 = arith.constant 64 : i32
    %70 = vector.broadcast %c64_i32_20 : i32 to vector<16x1xi32>
    %71 = arith.addi %69, %70 : vector<16x1xi32>
    %72 = vector.broadcast %71 : vector<16x1xi32> to vector<16x128xi32>
    %73 = arith.cmpi eq, %3, %72 : vector<16x128xi32>
    %74 = arith.extui %73 : vector<16x128xi1> to vector<16x128xi32>
    %75 = arith.sitofp %74 : vector<16x128xi32> to vector<16x128xf32>
    %76 = arith.addf %65, %75 : vector<16x128xf32>
    %cst_21 = arith.constant dense<0.000000e+00> : vector<16x32xf32>
    %77 = tpu.matmul %76, %50, %cst_21 {dimension_numbers = #tpu.dot_dimension_numbers<[1], [1], [0], [0], [0, 0, 1, 0], [], []>} : vector<16x128xf32>, vector<32x128xf32>, vector<16x32xf32> -> vector<16x32xf32>
    %78 = arith.subf %35, %77 : vector<16x32xf32>
    %79 = arith.addf %36, %77 : vector<16x32xf32>
    %cst_22 = arith.constant dense<0.000000e+00> : vector<1x128xf32>
    %80 = tpu.matmul %1, %76, %cst_22 {dimension_numbers = #tpu.dot_dimension_numbers<[1], [0], [0], [1], [0, 0, 1, 1], [], []>} : vector<1x16xf32>, vector<16x128xf32>, vector<1x128xf32> -> vector<1x128xf32>
    %81 = arith.mulf %78, %78 : vector<16x32xf32>
    %cst_23 = arith.constant dense<0.000000e+00> : vector<16xf32>
    %82 = vector.multi_reduction <add>, %81, %cst_23 [1] : vector<16x32xf32> to vector<16xf32>
    %83 = vector.shape_cast %82 : vector<16xf32> to vector<16x1xf32>
    %cst_24 = arith.constant dense<0.000000e+00> : vector<1xf32>
    %84 = vector.multi_reduction <add>, %83, %cst_24 [0] : vector<16x1xf32> to vector<1xf32>
    %85 = vector.shape_cast %84 : vector<1xf32> to vector<1x1xf32>
    %c1_i32 = arith.constant 1 : i32
    %86 = vector.broadcast %c1_i32 : i32 to vector<1x128xi32>
    %87 = arith.cmpi eq, %4, %86 : vector<1x128xi32>
    %cst_25 = arith.constant 0.000000e+00 : f32
    %88 = vector.shape_cast %85 : vector<1x1xf32> to vector<1x1xf32>
    %89 = vector.broadcast %88 : vector<1x1xf32> to vector<1x128xf32>
    %90 = vector.broadcast %cst_25 : f32 to vector<1x128xf32>
    %91 = arith.select %87, %89, %90 : vector<1x128xi1>, vector<1x128xf32>
    %92 = arith.addf %49, %91 : vector<1x128xf32>
    %c0_26 = arith.constant 0 : index
    %c0_27 = arith.constant 0 : index
    %93 = vector.load %arg4[%c0_26, %c0_27] : memref<16x32xf32, #tpu.memory_space<vmem>>, vector<16x32xf32>
    tpu.vector_store %arg4[%c0_26, %c0_27], %79 {strides = array<i32>} : memref<16x32xf32, #tpu.memory_space<vmem>>, vector<16x32xf32>,
    %94 = tpu.concatenate %15, %58, %25, %68 in 0 : vector<1x16xi32>, vector<1x16xi32>, vector<1x16xi32>, vector<1x16xi32> -> vector<4x16xi32>
    %c0_28 = arith.constant 0 : index
    %c0_29 = arith.constant 0 : index
    %95 = vector.load %arg5[%c0_28, %c0_29] : memref<4x16xi32, #tpu.memory_space<vmem>>, vector<4x16xi32>
    tpu.vector_store %arg5[%c0_28, %c0_29], %94 {strides = array<i32>} : memref<4x16xi32, #tpu.memory_space<vmem>>, vector<4x16xi32>,
    %96 = tpu.concatenate %37, %80, %92 in 0 : vector<1x128xf32>, vector<1x128xf32>, vector<1x128xf32> -> vector<3x128xf32>
    %97 = vector.shape_cast %96 : vector<3x128xf32> to vector<1x3x128xf32>
    %c0_30 = arith.constant 0 : index
    %c0_31 = arith.constant 0 : index
    %c0_32 = arith.constant 0 : index
    %98 = vector.load %arg6[%c0_30, %c0_31, %c0_32] : memref<1x3x128xf32, #tpu.memory_space<vmem>>, vector<1x3x128xf32>
    tpu.vector_store %arg6[%c0_30, %c0_31, %c0_32], %97 {strides = array<i32>} : memref<1x3x128xf32, #tpu.memory_space<vmem>>, vector<1x3x128xf32>,
    return
  }
  func.func @transform_0(%arg0: i32) -> (i32, i32) {
    %c0_i32 = arith.constant 0 : i32
    %c0_i32_0 = arith.constant 0 : i32
    return %arg0, %c0_i32 : i32, i32
  }
  func.func @transform_1(%arg0: i32) -> (i32, i32) {
    %c0_i32 = arith.constant 0 : i32
    %c0_i32_0 = arith.constant 0 : i32
    %c0_i32_1 = arith.constant 0 : i32
    return %c0_i32, %c0_i32_0 : i32, i32
  }
  func.func @transform_2(%arg0: i32) -> (i32, i32) {
    %c0_i32 = arith.constant 0 : i32
    %c0_i32_0 = arith.constant 0 : i32
    %c0_i32_1 = arith.constant 0 : i32
    return %c0_i32, %c0_i32_0 : i32, i32
  }
  func.func @transform_3(%arg0: i32) -> (i32, i32) {
    %c0_i32 = arith.constant 0 : i32
    %c0_i32_0 = arith.constant 0 : i32
    return %arg0, %c0_i32 : i32, i32
  }
  func.func @transform_4(%arg0: i32) -> (i32, i32) {
    %c0_i32 = arith.constant 0 : i32
    %c0_i32_0 = arith.constant 0 : i32
    return %c0_i32, %arg0 : i32, i32
  }
  func.func @transform_5(%arg0: i32) -> (i32, i32, i32) {
    %c0_i32 = arith.constant 0 : i32
    %c0_i32_0 = arith.constant 0 : i32
    %c0_i32_1 = arith.constant 0 : i32
    return %arg0, %c0_i32, %c0_i32_0 : i32, i32, i32
  }
}

</mosaic_0001>

<llo_original>
// kernel: tpu_custom_call.1
$region0: #{tpu_custom_call.1}
  #allocation0 [shape = 'u32[]', space=smem, size = 0x4, offset = 0x4, fixed_abs, tag = 'smem constant byte address 0x4 - core index']
  #allocation1 [shape = 'u32[144,128]{1,0:T(1,128)}', space=vmem, size = 0x12000, scoped, tag = 'internal scratch']
  %s0 = inlined_call_operand.hbm [shape: f32[16,32], index: 0, kind: input, shape index: {}]
  %s1 = inlined_call_operand.hbm [shape: f32[32,128], index: 1, kind: input, shape index: {}]
  %s2 = inlined_call_operand.hbm [shape: f32[1,128], index: 2, kind: input, shape index: {}]
  %s3 = inlined_call_operand.hbm [shape: f32[16,32], index: 3, kind: output, shape index: {0}]
  %s4 = inlined_call_operand.hbm [shape: s32[4,16], index: 4, kind: output, shape index: {1}]
  %s5 = inlined_call_operand.hbm [shape: f32[1,3,128], index: 5, kind: output, shape index: {2}]
  %6 = xla_tuple %s3, %s4, %s5
  %s7 = sld [smem:[#allocation0]]
  $region50: #{tpu_custom_call.1} parent=0
    _
  %s9 = ssub.s32 1, %s7
  %s10 = scalar_select 0, %s9, %s7
  $region1: #{tpu_custom_call.1} parent=0
    #allocation2 [shape = 'u8[8192]{0}', space=vmem, size = 0x2000, scoped, tag = 'input window, operand 0, single buffered']
    #allocation3 [shape = 's32[1]{0}', space=sflag, size = 0x4, scoped, tag = 'scoped memory for tpu_custom_call.1']
    #allocation4 [shape = 's32[1]{0}', space=sflag, size = 0x4, scoped, tag = 'scoped memory for tpu_custom_call.1']
    #allocation5 [shape = 'u8[16384]{0}', space=vmem, size = 0x4000, scoped, tag = 'input window, operand 1, single buffered']
    #allocation6 [shape = 's32[1]{0}', space=sflag, size = 0x4, scoped, tag = 'scoped memory for tpu_custom_call.1']
    #allocation7 [shape = 'u8[512]{0}', space=vmem, size = 0x400, scoped, tag = 'input window, operand 2, single buffered']
    #allocation8 [shape = 'u8[8192]{0}', space=vmem, size = 0x2000, scoped, tag = 'output window, operand 0, single buffered']
    #allocation9 [shape = 'u8[2048]{0}', space=vmem, size = 0x800, scoped, tag = 'output window, operand 1, single buffered']
    #allocation10 [shape = 's32[1]{0}', space=sflag, size = 0x4, scoped, tag = 'scoped memory for tpu_custom_call.1']
    #allocation11 [shape = 'u8[2048]{0}', space=vmem, size = 0x800, scoped, tag = 'output window, operand 2, single buffered']
    %11 = vsyncpa [#allocation3], 0
    %12 = vsyncpa [#allocation6], 0
    %13 = vsyncpa [#allocation4], 0
    %14 = vsyncpa [#allocation10], 0
    // Predicated region
    $region2: #{tpu_custom_call.1} parent=1 // pred_check
      _
    $region3: #{tpu_custom_call.1} parent=1 // pred_check_branch
      %16 = sbr.rel (0) target = $region5
    $region4: #{tpu_custom_call.1} parent=1 // pred_region
      %s18 = ssub.s32 256, 256
      %19 = vsyncadd [#allocation3], %s18
      %s20 = sshll.u32 [#allocation2], 4
      %s21 = int_to_ptr.vmem [resolvable:$true] %s20
      %26 = dma.hbm_to_vmem [thread:$0]  %s0, 256, %s21, [#allocation3], 128, 128, 8
    $region5: #{tpu_custom_call.1} parent=1 // pred_fallthru
      _
    // Predicated region
    $region6: #{tpu_custom_call.1} parent=1 // pred_check
      _
    $region7: #{tpu_custom_call.1} parent=1 // pred_check_branch
      %28 = sbr.rel (0) target = $region9
    $region8: #{tpu_custom_call.1} parent=1 // pred_region
      %s30 = ssub.s32 512, 512
      %31 = vsyncadd [#allocation6], %s30
      %s32 = sshll.u32 [#allocation5], 4
      %s33 = int_to_ptr.vmem [resolvable:$true] %s32
      %38 = dma.hbm_to_vmem [thread:$0]  %s1, 512, %s33, [#allocation6], 128, 128, 8
    $region9: #{tpu_custom_call.1} parent=1 // pred_fallthru
      _
    // Predicated region
    $region10: #{tpu_custom_call.1} parent=1 // pred_check
      _
    $region11: #{tpu_custom_call.1} parent=1 // pred_check_branch
      %40 = sbr.rel (0) target = $region13
    $region12: #{tpu_custom_call.1} parent=1 // pred_region
      %s42 = ssub.s32 16, 16
      %43 = vsyncadd [#allocation6], %s42
      %s45 = sshll.u32 [#allocation7], 4
      %s46 = int_to_ptr.vmem [resolvable:$true] %s45
      %48 = dma.hbm_to_vmem [thread:$0]  %s2, 16, %s46, [#allocation6]
    $region13: #{tpu_custom_call.1} parent=1 // pred_fallthru
      _
    // Predicated region
    $region14: #{tpu_custom_call.1} parent=1 // pred_check
      _
    $region15: #{tpu_custom_call.1} parent=1 // pred_check_branch
      %50 = sbr.rel (0) target = $region17
    $region16: #{tpu_custom_call.1} parent=1 // pred_region
      %51 = dma.done [#allocation3], 256
    $region17: #{tpu_custom_call.1} parent=1 // pred_fallthru
      _
    // Predicated region
    $region18: #{tpu_custom_call.1} parent=1 // pred_check
      _
    $region19: #{tpu_custom_call.1} parent=1 // pred_check_branch
      %53 = sbr.rel (0) target = $region21
    $region20: #{tpu_custom_call.1} parent=1 // pred_region
      %54 = dma.done [#allocation6], 512
    $region21: #{tpu_custom_call.1} parent=1 // pred_fallthru
      _
    // Predicated region
    $region22: #{tpu_custom_call.1} parent=1 // pred_check
      _
    $region23: #{tpu_custom_call.1} parent=1 // pred_check_branch
      %56 = sbr.rel (0) target = $region25
    $region24: #{tpu_custom_call.1} parent=1 // pred_region
      %57 = dma.done [#allocation6], 16
    $region25: #{tpu_custom_call.1} parent=1 // pred_fallthru
      _
    %v58 = vld [vmem:[#allocation2] sm:$0xff]
    %v59 = vld [vmem:[#allocation2 + $0x8] sm:$0xff]
    %v60 = vld [vmem:[#allocation7] sm:$0x1]
    %v61 = vlaneseq
    %v62 = vand.u32 %v61, 127
    %v63 = vld [vmem:[#allocation5] sm:$0xff]
    %v64 = vld [vmem:[#allocation5 + $0x8] sm:$0xff]
    %v65 = vld [vmem:[#allocation5 + $0x10] sm:$0xff]
    %v66 = vld [vmem:[#allocation5 + $0x18] sm:$0xff]
    %vm67 = vcmask 261120
    %v69 = vsel %vm67, %v58, 0
    %v72 = vsel %vm67, %v59, 0
    %74 = vmatprep.subr.mxu0 0.0
    %75 = vmatpush1.msra.mxu0 %v63
    %76 = vmatprep.subr.mxu0 0.0
    %77 = vmatpush1.msra.mxu0 %v64
    %78 = vmatprep.subr.mxu0 0.0
    %79 = vmatpush1.msra.mxu0 %v65
    %80 = vmatprep.subr.mxu0 0.0
    %81 = vmatpush1.msra.mxu0 %v66
    %82 = vmatprep.subr.mxu0 0.0
    %83 = vmatpush1.msra.mxu0 0.0
    %84 = vmatprep.subr.mxu0 0.0
    %85 = vmatpush1.msra.mxu0 0.0
    %86 = vmatprep.subr.mxu0 0.0
    %87 = vmatpush1.msra.mxu0 0.0
    %88 = vmatprep.subr.mxu0 0.0
    %89 = vmatpush1.msra.mxu0 0.0
    %90 = vmatprep.subr.mxu0 0.0
    %91 = vmatpush1.msra.mxu0 0.0
    %92 = vmatprep.subr.mxu0 0.0
    %93 = vmatpush1.msra.mxu0 0.0
    %94 = vmatprep.subr.mxu0 0.0
    %95 = vmatpush1.msra.mxu0 0.0
    %96 = vmatprep.subr.mxu0 0.0
    %97 = vmatpush1.msra.mxu0 0.0
    %98 = vmatprep.subr.mxu0 0.0
    %99 = vmatpush1.msra.mxu0 0.0
    %100 = vmatprep.subr.mxu0 0.0
    %101 = vmatpush1.msra.mxu0 0.0
    %102 = vmatprep.subr.mxu0 0.0
    %103 = vmatpush1.msra.mxu0 0.0
    %104 = vmatprep.subr.mxu0 0.0
    %105 = vmatpush1.msra.mxu0 0.0
    %106 = vmatprep.subr.mxu0 0.0
    %107 = vmatpush1.msra.mxu0 0.0
    %108 = vmatprep.subr.mxu0 0.0
    %109 = vmatpush1.msra.mxu0 0.0
    %110 = vmatprep.subr.mxu0 0.0
    %111 = vmatpush1.msra.mxu0 0.0
    %112 = vmatprep.subr.mxu0 0.0
    %113 = vmatpush1.msra.mxu0 0.0
    %114 = vmatprep.subr.mxu0 0.0
    %115 = vmatpush1.msra.mxu0 0.0
    %116 = vmatprep.subr.mxu0 0.0
    %117 = vmatpush1.msra.mxu0 0.0
    %118 = vmatprep.subr.mxu0 0.0
    %119 = vmatpush1.msra.mxu0 0.0
    %120 = vmatprep.subr.mxu0 0.0
    %121 = vmatpush1.msra.mxu0 0.0
    %122 = vmatprep.subr.mxu0 0.0
    %123 = vmatpush1.msra.mxu0 0.0
    %124 = vmatprep.subr.mxu0 0.0
    %125 = vmatpush1.msra.mxu0 0.0
    %126 = vmatprep.subr.mxu0 0.0
    %127 = vmatpush1.msra.mxu0 0.0
    %128 = vmatprep.subr.mxu0 0.0
    %129 = vmatpush1.msra.mxu0 0.0
    %130 = vmatprep.subr.mxu0 0.0
    %131 = vmatpush1.msra.mxu0 0.0
    %132 = vmatprep.subr.mxu0 0.0
    %133 = vmatpush1.msra.mxu0 0.0
    %134 = vmatprep.subr.mxu0 0.0
    %135 = vmatpush1.msra.mxu0 0.0
    %136 = vmatprep.subr.mxu0 0.0
    %137 = vmatpush1.msra.mxu0 0.0
    %138 = vmatprep.mubr.f32.mxu0 0.0
    %139 = vmatmul.mubr.f32.gmra.mrb[0].mxu0 %v69
    %v140 = vpop.f32.mrb[0].mxu0
    %v141 = vadd.f32 0.0, %v140
    %v142 = vpop.f32.mrb[0].mxu0
    %143 = vmatprep.mubr.f32.mxu0 0.0
    %144 = vmatmul.mubr.f32.gmra.mrb[0].mxu0 %v72
    %v145 = vpop.f32.mrb[0].mxu0
    %v146 = vadd.f32 0.0, %v145
    %v147 = vpop.f32.mrb[0].mxu0
    %148 = vdwg.mxu0
    %v149 = vmul.f32 %v141, 2.0
    %v150 = vmul.f32 %v146, 2.0
    %v152 = vlaneseq
    %v153 = vshrl.u32 %v152, 7
    %v154 = vsub.s32 0, %v153
    %v155 = vrot.slane %v60, %v154
    %v157 = vsub.f32 %v155, %v149
    %v158 = vsub.f32 %v155, %v150
    %vm159 = vcmask 523264
    %v160 = vsel %vm159, %v157, inf
    %161 = vmin.index.xlane.f32.xlu0 %v160
    %v162 = vpop.xlane.xlu0 %161
    %v163 = vsel %vm159, %v158, inf
    %164 = vmin.index.xlane.f32.xlu0 %v163
    %v165 = vpop.xlane.xlu0 %164
    %vm166 = vcmp.eq.s32.totalorder %v62, %v162
    %vm167 = vcmp.eq.s32.totalorder %v62, %v165
    %v168 = vsel %vm166, 1, 0
    %v169 = vsel %vm167, 1, 0
    %v170 = vcvt.s32.f32 %v168
    %v171 = vcvt.s32.f32 %v169
    %174 = vrot.lane.b32.xlu0 %v157, 64
    %v175 = vpop.permute.xlu0 %174
    %176 = vrot.lane.b32.xlu0 %v158, 64
    %v177 = vpop.permute.xlu0 %176
    %v180 = vsel %vm159, %v175, inf
    %181 = vmin.index.xlane.f32.xlu0 %v180
    %v182 = vpop.xlane.xlu0 %181
    %v183 = vsel %vm159, %v177, inf
    %184 = vmin.index.xlane.f32.xlu0 %v183
    %v185 = vpop.xlane.xlu0 %184
    %v186 = vadd.s32 %v182, 64
    %v187 = vadd.s32 %v185, 64
    %vm188 = vcmp.eq.s32.totalorder %v62, %v186
    %vm189 = vcmp.eq.s32.totalorder %v62, %v187
    %v190 = vsel %vm188, 1, 0
    %v191 = vsel %vm189, 1, 0
    %v192 = vcvt.s32.f32 %v190
    %v193 = vcvt.s32.f32 %v191
    %v194 = vadd.f32 %v170, %v192
    %v195 = vadd.f32 %v171, %v193
    %196 = vmatprep.subr.mxu0 0.0
    %197 = vmatpush1.xpose.msra.mxu0 %v63
    %198 = vmatprep.subr.mxu0 0.0
    %199 = vmatpush1.xpose.msra.mxu0 %v64
    %200 = vmatprep.subr.mxu0 0.0
    %201 = vmatpush1.xpose.msra.mxu0 %v65
    %202 = vmatprep.subr.mxu0 0.0
    %203 = vmatpush1.xpose.msra.mxu0 %v66
    %204 = vmatprep.subr.mxu0 0.0
    %205 = vmatpush1.xpose.msra.mxu0 0.0
    %206 = vmatprep.subr.mxu0 0.0
    %207 = vmatpush1.xpose.msra.mxu0 0.0
    %208 = vmatprep.subr.mxu0 0.0
    %209 = vmatpush1.xpose.msra.mxu0 0.0
    %210 = vmatprep.subr.mxu0 0.0
    %211 = vmatpush1.xpose.msra.mxu0 0.0
    %212 = vmatprep.subr.mxu0 0.0
    %213 = vmatpush1.xpose.msra.mxu0 0.0
    %214 = vmatprep.subr.mxu0 0.0
    %215 = vmatpush1.xpose.msra.mxu0 0.0
    %216 = vmatprep.subr.mxu0 0.0
    %217 = vmatpush1.xpose.msra.mxu0 0.0
    %218 = vmatprep.subr.mxu0 0.0
    %219 = vmatpush1.xpose.msra.mxu0 0.0
    %220 = vmatprep.subr.mxu0 0.0
    %221 = vmatpush1.xpose.msra.mxu0 0.0
    %222 = vmatprep.subr.mxu0 0.0
    %223 = vmatpush1.xpose.msra.mxu0 0.0
    %224 = vmatprep.subr.mxu0 0.0
    %225 = vmatpush1.xpose.msra.mxu0 0.0
    %226 = vmatprep.subr.mxu0 0.0
    %227 = vmatpush1.xpose.msra.mxu0 0.0
    %228 = vmatprep.subr.mxu0 0.0
    %229 = vmatpush1.xpose.msra.mxu0 0.0
    %230 = vmatprep.subr.mxu0 0.0
    %231 = vmatpush1.xpose.msra.mxu0 0.0
    %232 = vmatprep.subr.mxu0 0.0
    %233 = vmatpush1.xpose.msra.mxu0 0.0
    %234 = vmatprep.subr.mxu0 0.0
    %235 = vmatpush1.xpose.msra.mxu0 0.0
    %236 = vmatprep.subr.mxu0 0.0
    %237 = vmatpush1.xpose.msra.mxu0 0.0
    %238 = vmatprep.subr.mxu0 0.0
    %239 = vmatpush1.xpose.msra.mxu0 0.0
    %240 = vmatprep.subr.mxu0 0.0
    %241 = vmatpush1.xpose.msra.mxu0 0.0
    %242 = vmatprep.subr.mxu0 0.0
    %243 = vmatpush1.xpose.msra.mxu0 0.0
    %244 = vmatprep.subr.mxu0 0.0
    %245 = vmatpush1.xpose.msra.mxu0 0.0
    %246 = vmatprep.subr.mxu0 0.0
    %247 = vmatpush1.xpose.msra.mxu0 0.0
    %248 = vmatprep.subr.mxu0 0.0
    %249 = vmatpush1.xpose.msra.mxu0 0.0
    %250 = vmatprep.subr.mxu0 0.0
    %251 = vmatpush1.xpose.msra.mxu0 0.0
    %252 = vmatprep.subr.mxu0 0.0
    %253 = vmatpush1.xpose.msra.mxu0 0.0
    %254 = vmatprep.subr.mxu0 0.0
    %255 = vmatpush1.xpose.msra.mxu0 0.0
    %256 = vmatprep.subr.mxu0 0.0
    %257 = vmatpush1.xpose.msra.mxu0 0.0
    %258 = vmatprep.subr.mxu0 0.0
    %259 = vmatpush1.xpose.msra.mxu0 0.0
    %260 = vmatprep.mubr.f32.mxu0 0.0
    %261 = vmatmul.mubr.f32.gmra.mrb[0].mxu0 %v194
    %v262 = vpop.f32.mrb[0].mxu0
    %v263 = vadd.f32 0.0, %v262
    %v264 = vpop.f32.mrb[0].mxu0
    %265 = vmatprep.mubr.f32.mxu0 0.0
    %266 = vmatmul.mubr.f32.gmra.mrb[0].mxu0 %v195
    %v267 = vpop.f32.mrb[0].mxu0
    %v268 = vadd.f32 0.0, %v267
    %v269 = vpop.f32.mrb[0].mxu0
    %270 = vdwg.mxu0
    %v271 = vsub.f32 %v58, %v263
    %v272 = vsub.f32 %v59, %v268
    %v273 = vadd.f32 %v263, 0.0
    %v274 = vadd.f32 %v268, 0.0
    %vm275 = vcmask 130048
    %v277 = vsel %vm275, 1.0, 0
    %279 = vmatprep.subr.mxu0 0.0
    %280 = vmatpush1.msra.mxu0 %v194
    %281 = vmatprep.subr.mxu0 0.0
    %282 = vmatpush1.msra.mxu0 %v195
    %283 = vmatprep.subr.mxu0 0.0
    %284 = vmatpush1.msra.mxu0 0.0
    %285 = vmatprep.subr.mxu0 0.0
    %286 = vmatpush1.msra.mxu0 0.0
    %287 = vmatprep.subr.mxu0 0.0
    %288 = vmatpush1.msra.mxu0 0.0
    %289 = vmatprep.subr.mxu0 0.0
    %290 = vmatpush1.msra.mxu0 0.0
    %291 = vmatprep.subr.mxu0 0.0
    %292 = vmatpush1.msra.mxu0 0.0
    %293 = vmatprep.subr.mxu0 0.0
    %294 = vmatpush1.msra.mxu0 0.0
    %295 = vmatprep.subr.mxu0 0.0
    %296 = vmatpush1.msra.mxu0 0.0
    %297 = vmatprep.subr.mxu0 0.0
    %298 = vmatpush1.msra.mxu0 0.0
    %299 = vmatprep.subr.mxu0 0.0
    %300 = vmatpush1.msra.mxu0 0.0
    %301 = vmatprep.subr.mxu0 0.0
    %302 = vmatpush1.msra.mxu0 0.0
    %303 = vmatprep.subr.mxu0 0.0
    %304 = vmatpush1.msra.mxu0 0.0
    %305 = vmatprep.subr.mxu0 0.0
    %306 = vmatpush1.msra.mxu0 0.0
    %307 = vmatprep.subr.mxu0 0.0
    %308 = vmatpush1.msra.mxu0 0.0
    %309 = vmatprep.subr.mxu0 0.0
    %310 = vmatpush1.msra.mxu0 0.0
    %311 = vmatprep.subr.mxu0 0.0
    %312 = vmatpush1.msra.mxu0 0.0
    %313 = vmatprep.subr.mxu0 0.0
    %314 = vmatpush1.msra.mxu0 0.0
    %315 = vmatprep.subr.mxu0 0.0
    %316 = vmatpush1.msra.mxu0 0.0
    %317 = vmatprep.subr.mxu0 0.0
    %318 = vmatpush1.msra.mxu0 0.0
    %319 = vmatprep.subr.mxu0 0.0
    %320 = vmatpush1.msra.mxu0 0.0
    %321 = vmatprep.subr.mxu0 0.0
    %322 = vmatpush1.msra.mxu0 0.0
    %323 = vmatprep.subr.mxu0 0.0
    %324 = vmatpush1.msra.mxu0 0.0
    %325 = vmatprep.subr.mxu0 0.0
    %326 = vmatpush1.msra.mxu0 0.0
    %327 = vmatprep.subr.mxu0 0.0
    %328 = vmatpush1.msra.mxu0 0.0
    %329 = vmatprep.subr.mxu0 0.0
    %330 = vmatpush1.msra.mxu0 0.0
    %331 = vmatprep.subr.mxu0 0.0
    %332 = vmatpush1.msra.mxu0 0.0
    %333 = vmatprep.subr.mxu0 0.0
    %334 = vmatpush1.msra.mxu0 0.0
    %335 = vmatprep.subr.mxu0 0.0
    %336 = vmatpush1.msra.mxu0 0.0
    %337 = vmatprep.subr.mxu0 0.0
    %338 = vmatpush1.msra.mxu0 0.0
    %339 = vmatprep.subr.mxu0 0.0
    %340 = vmatpush1.msra.mxu0 0.0
    %341 = vmatprep.subr.mxu0 0.0
    %342 = vmatpush1.msra.mxu0 0.0
    %343 = vmatprep.mubr.f32.mxu0 0.0
    %344 = vmatmul.mubr.f32.gmra.mrb[0].mxu0 %v277
    %v345 = vpop.f32.mrb[0].mxu0
    %v346 = vadd.f32 0.0, %v345
    %v347 = vpop.f32.mrb[0].mxu0
    %348 = vdwg.mxu0
    %v349 = vmul.f32 %v271, %v271
    %v350 = vmul.f32 %v272, %v272
    %v351 = vsel %vm67, %v349, 0.0
    %352 = vadd.xlane.f32.xlu0 %v351
    %v353 = vpop.xlane.xlu0 %352
    %v354 = vsel %vm67, %v350, 0.0
    %355 = vadd.xlane.f32.xlu0 %v354
    %v356 = vpop.xlane.xlu0 %355
    %v357 = vadd.f32 %v353, %v356
    %v358 = vrot.slane %v357, 4
    %v359 = vadd.f32 %v357, %v358
    %v360 = vrot.slane %v359, 2
    %v361 = vadd.f32 %v359, %v360
    %v362 = vrot.slane %v361, 1
    %v363 = vadd.f32 %v361, %v362
    %vm364 = vcmp.eq.s32.totalorder %v62, 0
    %v365 = vsel %vm364, %v363, 0.0
    %v366 = vadd.f32 %v365, 0.0
    %v368 = vsel %vm67, %v271, 0
    %v371 = vsel %vm67, %v272, 0
    %373 = vmatprep.subr.mxu0 0.0
    %374 = vmatpush1.msra.mxu0 %v63
    %375 = vmatprep.subr.mxu0 0.0
    %376 = vmatpush1.msra.mxu0 %v64
    %377 = vmatprep.subr.mxu0 0.0
    %378 = vmatpush1.msra.mxu0 %v65
    %379 = vmatprep.subr.mxu0 0.0
    %380 = vmatpush1.msra.mxu0 %v66
    %381 = vmatprep.subr.mxu0 0.0
    %382 = vmatpush1.msra.mxu0 0.0
    %383 = vmatprep.subr.mxu0 0.0
    %384 = vmatpush1.msra.mxu0 0.0
    %385 = vmatprep.subr.mxu0 0.0
    %386 = vmatpush1.msra.mxu0 0.0
    %387 = vmatprep.subr.mxu0 0.0
    %388 = vmatpush1.msra.mxu0 0.0
    %389 = vmatprep.subr.mxu0 0.0
    %390 = vmatpush1.msra.mxu0 0.0
    %391 = vmatprep.subr.mxu0 0.0
    %392 = vmatpush1.msra.mxu0 0.0
    %393 = vmatprep.subr.mxu0 0.0
    %394 = vmatpush1.msra.mxu0 0.0
    %395 = vmatprep.subr.mxu0 0.0
    %396 = vmatpush1.msra.mxu0 0.0
    %397 = vmatprep.subr.mxu0 0.0
    %398 = vmatpush1.msra.mxu0 0.0
    %399 = vmatprep.subr.mxu0 0.0
    %400 = vmatpush1.msra.mxu0 0.0
    %401 = vmatprep.subr.mxu0 0.0
    %402 = vmatpush1.msra.mxu0 0.0
    %403 = vmatprep.subr.mxu0 0.0
    %404 = vmatpush1.msra.mxu0 0.0
    %405 = vmatprep.subr.mxu0 0.0
    %406 = vmatpush1.msra.mxu0 0.0
    %407 = vmatprep.subr.mxu0 0.0
    %408 = vmatpush1.msra.mxu0 0.0
    %409 = vmatprep.subr.mxu0 0.0
    %410 = vmatpush1.msra.mxu0 0.0
    %411 = vmatprep.subr.mxu0 0.0
    %412 = vmatpush1.msra.mxu0 0.0
    %413 = vmatprep.subr.mxu0 0.0
    %414 = vmatpush1.msra.mxu0 0.0
    %415 = vmatprep.subr.mxu0 0.0
    %416 = vmatpush1.msra.mxu0 0.0
    %417 = vmatprep.subr.mxu0 0.0
    %418 = vmatpush1.msra.mxu0 0.0
    %419 = vmatprep.subr.mxu0 0.0
    %420 = vmatpush1.msra.mxu0 0.0
    %421 = vmatprep.subr.mxu0 0.0
    %422 = vmatpush1.msra.mxu0 0.0
    %423 = vmatprep.subr.mxu0 0.0
    %424 = vmatpush1.msra.mxu0 0.0
    %425 = vmatprep.subr.mxu0 0.0
    %426 = vmatpush1.msra.mxu0 0.0
    %427 = vmatprep.subr.mxu0 0.0
    %428 = vmatpush1.msra.mxu0 0.0
    %429 = vmatprep.subr.mxu0 0.0
    %430 = vmatpush1.msra.mxu0 0.0
    %431 = vmatprep.subr.mxu0 0.0
    %432 = vmatpush1.msra.mxu0 0.0
    %433 = vmatprep.subr.mxu0 0.0
    %434 = vmatpush1.msra.mxu0 0.0
    %435 = vmatprep.subr.mxu0 0.0
    %436 = vmatpush1.msra.mxu0 0.0
    %437 = vmatprep.mubr.f32.mxu0 0.0
    %438 = vmatmul.mubr.f32.gmra.mrb[0].mxu0 %v368
    %v439 = vpop.f32.mrb[0].mxu0
    %v440 = vadd.f32 0.0, %v439
    %v441 = vpop.f32.mrb[0].mxu0
    %442 = vmatprep.mubr.f32.mxu0 0.0
    %443 = vmatmul.mubr.f32.gmra.mrb[0].mxu0 %v371
    %v444 = vpop.f32.mrb[0].mxu0
    %v445 = vadd.f32 0.0, %v444
    %v446 = vpop.f32.mrb[0].mxu0
    %447 = vdwg.mxu0
    %v448 = vmul.f32 %v440, 2.0
    %v449 = vmul.f32 %v445, 2.0
    %v450 = vsub.f32 %v155, %v448
    %v451 = vsub.f32 %v155, %v449
    %v452 = vsel %vm159, %v450, inf
    %453 = vmin.index.xlane.f32.xlu0 %v452
    %v454 = vpop.xlane.xlu0 %453
    %v455 = vsel %vm159, %v451, inf
    %456 = vmin.index.xlane.f32.xlu0 %v455
    %v457 = vpop.xlane.xlu0 %456
    %vm458 = vcmp.eq.s32.totalorder %v62, %v454
    %vm459 = vcmp.eq.s32.totalorder %v62, %v457
    %v460 = vsel %vm458, 1, 0
    %v461 = vsel %vm459, 1, 0
    %v462 = vcvt.s32.f32 %v460
    %v463 = vcvt.s32.f32 %v461
    %466 = vrot.lane.b32.xlu0 %v450, 64
    %v467 = vpop.permute.xlu0 %466
    %468 = vrot.lane.b32.xlu0 %v451, 64
    %v469 = vpop.permute.xlu0 %468
    %v472 = vsel %vm159, %v467, inf
    %473 = vmin.index.xlane.f32.xlu0 %v472
    %v474 = vpop.xlane.xlu0 %473
    %v475 = vsel %vm159, %v469, inf
    %476 = vmin.index.xlane.f32.xlu0 %v475
    %v477 = vpop.xlane.xlu0 %476
    %v478 = vadd.s32 %v474, 64
    %v479 = vadd.s32 %v477, 64
    %vm480 = vcmp.eq.s32.totalorder %v62, %v478
    %vm481 = vcmp.eq.s32.totalorder %v62, %v479
    %v482 = vsel %vm480, 1, 0
    %v483 = vsel %vm481, 1, 0
    %v484 = vcvt.s32.f32 %v482
    %v485 = vcvt.s32.f32 %v483
    %v486 = vadd.f32 %v462, %v484
    %v487 = vadd.f32 %v463, %v485
    %488 = vmatprep.subr.mxu0 0.0
    %489 = vmatpush1.xpose.msra.mxu0 %v63
    %490 = vmatprep.subr.mxu0 0.0
    %491 = vmatpush1.xpose.msra.mxu0 %v64
    %492 = vmatprep.subr.mxu0 0.0
    %493 = vmatpush1.xpose.msra.mxu0 %v65
    %494 = vmatprep.subr.mxu0 0.0
    %495 = vmatpush1.xpose.msra.mxu0 %v66
    %496 = vmatprep.subr.mxu0 0.0
    %497 = vmatpush1.xpose.msra.mxu0 0.0
    %498 = vmatprep.subr.mxu0 0.0
    %499 = vmatpush1.xpose.msra.mxu0 0.0
    %500 = vmatprep.subr.mxu0 0.0
    %501 = vmatpush1.xpose.msra.mxu0 0.0
    %502 = vmatprep.subr.mxu0 0.0
    %503 = vmatpush1.xpose.msra.mxu0 0.0
    %504 = vmatprep.subr.mxu0 0.0
    %505 = vmatpush1.xpose.msra.mxu0 0.0
    %506 = vmatprep.subr.mxu0 0.0
    %507 = vmatpush1.xpose.msra.mxu0 0.0
    %508 = vmatprep.subr.mxu0 0.0
    %509 = vmatpush1.xpose.msra.mxu0 0.0
    %510 = vmatprep.subr.mxu0 0.0
    %511 = vmatpush1.xpose.msra.mxu0 0.0
    %512 = vmatprep.subr.mxu0 0.0
    %513 = vmatpush1.xpose.msra.mxu0 0.0
    %514 = vmatprep.subr.mxu0 0.0
    %515 = vmatpush1.xpose.msra.mxu0 0.0
    %516 = vmatprep.subr.mxu0 0.0
    %517 = vmatpush1.xpose.msra.mxu0 0.0
    %518 = vmatprep.subr.mxu0 0.0
    %519 = vmatpush1.xpose.msra.mxu0 0.0
    %520 = vmatprep.subr.mxu0 0.0
    %521 = vmatpush1.xpose.msra.mxu0 0.0
    %522 = vmatprep.subr.mxu0 0.0
    %523 = vmatpush1.xpose.msra.mxu0 0.0
    %524 = vmatprep.subr.mxu0 0.0
    %525 = vmatpush1.xpose.msra.mxu0 0.0
    %526 = vmatprep.subr.mxu0 0.0
    %527 = vmatpush1.xpose.msra.mxu0 0.0
    %528 = vmatprep.subr.mxu0 0.0
    %529 = vmatpush1.xpose.msra.mxu0 0.0
    %530 = vmatprep.subr.mxu0 0.0
    %531 = vmatpush1.xpose.msra.mxu0 0.0
    %532 = vmatprep.subr.mxu0 0.0
    %533 = vmatpush1.xpose.msra.mxu0 0.0
    %534 = vmatprep.subr.mxu0 0.0
    %535 = vmatpush1.xpose.msra.mxu0 0.0
    %536 = vmatprep.subr.mxu0 0.0
    %537 = vmatpush1.xpose.msra.mxu0 0.0
    %538 = vmatprep.subr.mxu0 0.0
    %539 = vmatpush1.xpose.msra.mxu0 0.0
    %540 = vmatprep.subr.mxu0 0.0
    %541 = vmatpush1.xpose.msra.mxu0 0.0
    %542 = vmatprep.subr.mxu0 0.0
    %543 = vmatpush1.xpose.msra.mxu0 0.0
    %544 = vmatprep.subr.mxu0 0.0
    %545 = vmatpush1.xpose.msra.mxu0 0.0
    %546 = vmatprep.subr.mxu0 0.0
    %547 = vmatpush1.xpose.msra.mxu0 0.0
    %548 = vmatprep.subr.mxu0 0.0
    %549 = vmatpush1.xpose.msra.mxu0 0.0
    %550 = vmatprep.subr.mxu0 0.0
    %551 = vmatpush1.xpose.msra.mxu0 0.0
    %552 = vmatprep.mubr.f32.mxu0 0.0
    %553 = vmatmul.mubr.f32.gmra.mrb[0].mxu0 %v486
    %v554 = vpop.f32.mrb[0].mxu0
    %v555 = vadd.f32 0.0, %v554
    %v556 = vpop.f32.mrb[0].mxu0
    %557 = vmatprep.mubr.f32.mxu0 0.0
    %558 = vmatmul.mubr.f32.gmra.mrb[0].mxu0 %v487
    %v559 = vpop.f32.mrb[0].mxu0
    %v560 = vadd.f32 0.0, %v559
    %v561 = vpop.f32.mrb[0].mxu0
    %562 = vdwg.mxu0
    %v563 = vsub.f32 %v271, %v555
    %v564 = vsub.f32 %v272, %v560
    %v565 = vadd.f32 %v273, %v555
    %v566 = vadd.f32 %v274, %v560
    %567 = vmatprep.subr.mxu0 0.0
    %568 = vmatpush1.msra.mxu0 %v486
    %569 = vmatprep.subr.mxu0 0.0
    %570 = vmatpush1.msra.mxu0 %v487
    %571 = vmatprep.subr.mxu0 0.0
    %572 = vmatpush1.msra.mxu0 0.0
    %573 = vmatprep.subr.mxu0 0.0
    %574 = vmatpush1.msra.mxu0 0.0
    %575 = vmatprep.subr.mxu0 0.0
    %576 = vmatpush1.msra.mxu0 0.0
    %577 = vmatprep.subr.mxu0 0.0
    %578 = vmatpush1.msra.mxu0 0.0
    %579 = vmatprep.subr.mxu0 0.0
    %580 = vmatpush1.msra.mxu0 0.0
    %581 = vmatprep.subr.mxu0 0.0
    %582 = vmatpush1.msra.mxu0 0.0
    %583 = vmatprep.subr.mxu0 0.0
    %584 = vmatpush1.msra.mxu0 0.0
    %585 = vmatprep.subr.mxu0 0.0
    %586 = vmatpush1.msra.mxu0 0.0
    %587 = vmatprep.subr.mxu0 0.0
    %588 = vmatpush1.msra.mxu0 0.0
    %589 = vmatprep.subr.mxu0 0.0
    %590 = vmatpush1.msra.mxu0 0.0
    %591 = vmatprep.subr.mxu0 0.0
    %592 = vmatpush1.msra.mxu0 0.0
    %593 = vmatprep.subr.mxu0 0.0
    %594 = vmatpush1.msra.mxu0 0.0
    %595 = vmatprep.subr.mxu0 0.0
    %596 = vmatpush1.msra.mxu0 0.0
    %597 = vmatprep.subr.mxu0 0.0
    %598 = vmatpush1.msra.mxu0 0.0
    %599 = vmatprep.subr.mxu0 0.0
    %600 = vmatpush1.msra.mxu0 0.0
    %601 = vmatprep.subr.mxu0 0.0
    %602 = vmatpush1.msra.mxu0 0.0
    %603 = vmatprep.subr.mxu0 0.0
    %604 = vmatpush1.msra.mxu0 0.0
    %605 = vmatprep.subr.mxu0 0.0
    %606 = vmatpush1.msra.mxu0 0.0
    %607 = vmatprep.subr.mxu0 0.0
    %608 = vmatpush1.msra.mxu0 0.0
    %609 = vmatprep.subr.mxu0 0.0
    %610 = vmatpush1.msra.mxu0 0.0
    %611 = vmatprep.subr.mxu0 0.0
    %612 = vmatpush1.msra.mxu0 0.0
    %613 = vmatprep.subr.mxu0 0.0
    %614 = vmatpush1.msra.mxu0 0.0
    %615 = vmatprep.subr.mxu0 0.0
    %616 = vmatpush1.msra.mxu0 0.0
    %617 = vmatprep.subr.mxu0 0.0
    %618 = vmatpush1.msra.mxu0 0.0
    %619 = vmatprep.subr.mxu0 0.0
    %620 = vmatpush1.msra.mxu0 0.0
    %621 = vmatprep.subr.mxu0 0.0
    %622 = vmatpush1.msra.mxu0 0.0
    %623 = vmatprep.subr.mxu0 0.0
    %624 = vmatpush1.msra.mxu0 0.0
    %625 = vmatprep.subr.mxu0 0.0
    %626 = vmatpush1.msra.mxu0 0.0
    %627 = vmatprep.subr.mxu0 0.0
    %628 = vmatpush1.msra.mxu0 0.0
    %629 = vmatprep.subr.mxu0 0.0
    %630 = vmatpush1.msra.mxu0 0.0
    %631 = vmatprep.mubr.f32.mxu0 0.0
    %632 = vmatmul.mubr.f32.gmra.mrb[0].mxu0 %v277
    %v633 = vpop.f32.mrb[0].mxu0
    %v634 = vadd.f32 0.0, %v633
    %v635 = vpop.f32.mrb[0].mxu0
    %636 = vdwg.mxu0
    %v637 = vmul.f32 %v563, %v563
    %v638 = vmul.f32 %v564, %v564
    %v639 = vsel %vm67, %v637, 0.0
    %640 = vadd.xlane.f32.xlu0 %v639
    %v641 = vpop.xlane.xlu0 %640
    %v642 = vsel %vm67, %v638, 0.0
    %643 = vadd.xlane.f32.xlu0 %v642
    %v644 = vpop.xlane.xlu0 %643
    %v645 = vadd.f32 %v641, %v644
    %v646 = vrot.slane %v645, 4
    %v647 = vadd.f32 %v645, %v646
    %v648 = vrot.slane %v647, 2
    %v649 = vadd.f32 %v647, %v648
    %v650 = vrot.slane %v649, 1
    %v651 = vadd.f32 %v649, %v650
    %vm652 = vcmp.eq.s32.totalorder %v62, 1
    %v653 = vsel %vm652, %v651, 0.0
    %v654 = vadd.f32 %v366, %v653
    %655 = vst.msk [vmem:[#allocation8] sm:$0xff] %vm67, %v565
    %656 = vst.msk [vmem:[#allocation8 + $0x8] sm:$0xff] %vm67, %v566
    %v657 = vlaneseq
    %v658 = vshrl.u32 %v657, 7
    %v659 = vsub.s32 %v62, %v658
    %v660 = vrot.slane %v162, %v659
    %v661 = vadd.s32 %v62, 4294967288
    %v662 = vlaneseq
    %v663 = vshrl.u32 %v662, 7
    %v664 = vsub.s32 %v661, %v663
    %v665 = vrot.slane %v165, %v664
    %vm666 = vcmask 130112
    %v667 = vsel %vm666, %v665, %v660
    %v668 = vlaneseq
    %v669 = vshrl.u32 %v668, 7
    %v670 = vsub.s32 %v62, %v669
    %v671 = vrot.slane %v454, %v670
    %v672 = vlaneseq
    %v673 = vshrl.u32 %v672, 7
    %v674 = vsub.s32 %v661, %v673
    %v675 = vrot.slane %v457, %v674
    %v676 = vsel %vm666, %v675, %v671
    %v677 = vlaneseq
    %v678 = vshrl.u32 %v677, 7
    %v679 = vsub.s32 %v62, %v678
    %v680 = vrot.slane %v182, %v679
    %v681 = vlaneseq
    %v682 = vshrl.u32 %v681, 7
    %v683 = vsub.s32 %v661, %v682
    %v684 = vrot.slane %v185, %v683
    %v685 = vsel %vm666, %v684, %v680
    %v686 = vlaneseq
    %v687 = vshrl.u32 %v686, 7
    %v688 = vsub.s32 %v62, %v687
    %v689 = vrot.slane %v474, %v688
    %v690 = vlaneseq
    %v691 = vshrl.u32 %v690, 7
    %v692 = vsub.s32 %v661, %v691
    %v693 = vrot.slane %v477, %v692
    %v694 = vsel %vm666, %v693, %v689
    %vm695 = vcmask 1040384
    %v696 = vsel %vm695, %v667, %v676
    %vm697 = vcmask 1041408
    %v698 = vsel %vm697, %v696, %v685
    %vm699 = vcmask 1042432
    %v700 = vsel %vm699, %v698, %v694
    %vm701 = vcmask 125952
    %702 = vst.msk [vmem:[#allocation9] sm:$0xf] %vm701, %v700
    %v704 = vrot.slane %v634, 7
    %v706 = vsel %vm695, %v346, %v704
    %v707 = vsel %vm697, %v706, %v654
    %708 = vst [vmem:[#allocation11] sm:$0x7] %v707
    // Predicated region
    $region26: #{tpu_custom_call.1} parent=1 // pred_check
      _
    $region27: #{tpu_custom_call.1} parent=1 // pred_check_branch
      %710 = sbr.rel (0) target = $region29
    $region28: #{tpu_custom_call.1} parent=1 // pred_region
      %s712 = ssub.s32 256, 256
      %713 = vsyncadd [#allocation4], %s712
      %s714 = sshll.u32 [#allocation8], 4
      %s715 = int_to_ptr.vmem [resolvable:$true] %s714
      %720 = dma.vmem_to_hbm [thread:$0]  %s715, 256, %s3, [#allocation4], 128, 128, 8
    $region29: #{tpu_custom_call.1} parent=1 // pred_fallthru
      _
    // Predicated region
    $region30: #{tpu_custom_call.1} parent=1 // pred_check
      _
    $region31: #{tpu_custom_call.1} parent=1 // pred_check_branch
      %722 = sbr.rel (0) target = $region33
    $region32: #{tpu_custom_call.1} parent=1 // pred_region
      %s724 = ssub.s32 64, 64
      %725 = vsyncadd [#allocation10], %s724
      %s727 = sshll.u32 [#allocation9], 4
      %s728 = int_to_ptr.vmem [resolvable:$true] %s727
      %730 = dma.vmem_to_hbm [thread:$0]  %s728, 64, %s4, [#allocation10]
    $region33: #{tpu_custom_call.1} parent=1 // pred_fallthru
      _
    // Predicated region
    $region34: #{tpu_custom_call.1} parent=1 // pred_check
      _
    $region35: #{tpu_custom_call.1} parent=1 // pred_check_branch
      %732 = sbr.rel (0) target = $region37
    $region36: #{tpu_custom_call.1} parent=1 // pred_region
      %s734 = ssub.s32 64, 64
      %735 = vsyncadd [#allocation10], %s734
      %s737 = sshll.u32 [#allocation11], 4
      %s738 = int_to_ptr.vmem [resolvable:$true] %s737
      %740 = dma.vmem_to_hbm [thread:$0]  %s738, 64, %s5, [#allocation10]
    $region37: #{tpu_custom_call.1} parent=1 // pred_fallthru
      _
    // Predicated region
    $region38: #{tpu_custom_call.1} parent=1 // pred_check
      _
    $region39: #{tpu_custom_call.1} parent=1 // pred_check_branch
      %742 = sbr.rel (0) target = $region41
    $region40: #{tpu_custom_call.1} parent=1 // pred_region
      %743 = dma.done [#allocation4], 256
    $region41: #{tpu_custom_call.1} parent=1 // pred_fallthru
      _
    // Predicated region
    $region42: #{tpu_custom_call.1} parent=1 // pred_check
      _
    $region43: #{tpu_custom_call.1} parent=1 // pred_check_branch
      %745 = sbr.rel (0) target = $region45
    $region44: #{tpu_custom_call.1} parent=1 // pred_region
      %746 = dma.done [#allocation10], 64
    $region45: #{tpu_custom_call.1} parent=1 // pred_fallthru
      _
    // Predicated region
    $region46: #{tpu_custom_call.1} parent=1 // pred_check
      _
    $region47: #{tpu_custom_call.1} parent=1 // pred_check_branch
      %748 = sbr.rel (0) target = $region49
    $region48: #{tpu_custom_call.1} parent=1 // pred_region
      %749 = dma.done [#allocation10], 64
    $region49: #{tpu_custom_call.1} parent=1 // pred_fallthru
      _
    %750 = vsyncpa [#allocation3], 1
    %751 = vsyncpa [#allocation6], 1
    %752 = vsyncpa [#allocation4], 1
    %753 = vsyncpa [#allocation10], 1

</llo_original>
